<compile_context>
chip_gen: v5e
topology: v5e:2x2
jax: 0.10.0
libtpu: 0.0.40
codegen_flags: <defaults>
</compile_context>

<pallas_src>
import math
from functools import partial

import jax
import jax.numpy as jnp
from jax.experimental import pallas as pl
from jax.experimental.pallas import tpu as pltpu

NUM_CLASSES = 24


def _round_up(x, m):
    return (x + m - 1) // m * m


def _masked_hour_kernel(x_ref, wt_ref, b_ref, t_ref, part_ref, *, tm, n_valid):
    # x_ref:    (TM, E)   f32  activation row tile (B*L flattened, zero-padded)
    # wt_ref:   (E, 24)   f32  linear weight, transposed (constant block)
    # b_ref:    (1, 24)   f32  linear bias (constant block)
    # t_ref:    (TM, 1)   i32  target hour per row (zero-padded)
    # part_ref: (1, 1, 1) f32  per-tile partial loss sum (independent per step)
    step = pl.program_id(0)

    # Linear layer on the MXU: (TM, E) @ (E, 24) + bias.
    logits = jnp.dot(x_ref[...], wt_ref[...],
                     preferred_element_type=jnp.float32) + b_ref[...]

    # Numerically-stable cross entropy: loss_row = logsumexp(logits) - logits[target].
    m = jnp.max(logits, axis=-1, keepdims=True)                       # (TM, 1)
    lse = m + jnp.log(jnp.sum(jnp.exp(logits - m), axis=-1, keepdims=True))
    cls = jax.lax.broadcasted_iota(jnp.int32, logits.shape, 1)        # (TM, 24)
    tgt_logit = jnp.sum(jnp.where(cls == t_ref[...], logits, 0.0),
                        axis=-1, keepdims=True)                       # (TM, 1)
    row_loss = lse - tgt_logit                                        # (TM, 1)

    # Zero out padded rows so they don't contribute to the mean.
    row_idx = step * tm + jax.lax.broadcasted_iota(jnp.int32, row_loss.shape, 0)
    row_loss = jnp.where(row_idx < n_valid, row_loss, 0.0)

    # Independent per-tile partial -> grid axis stays "parallel" (megacore).
    part_ref[0] = jnp.sum(row_loss, keepdims=True)                    # (1, 1)


def masked_hour_loss(x, origin_hour, weight, bias, *, tm=512):
    """MaskedHour.forward: CE(Linear(Dropout(x)).reshape(-1,24), origin_hour.reshape(-1)).

    x: (B, L, E) float; origin_hour: (B, L) int; weight: (24, E); bias: (24,).
    Returns the scalar mean cross-entropy loss (float32).
    """
    B, L, E = x.shape
    n = B * L

    # Eval-mode dropout == identity (see TODO at top of file).
    x2 = x.reshape(n, E).astype(jnp.float32)
    t2 = origin_hour.reshape(n, 1).astype(jnp.int32)

    # Row tiling: big TM tiles keep the (HBM-bound) activation stream near roofline.
    tm_eff = min(tm, _round_up(n, 8))
    n_pad = _round_up(n, tm_eff)
    if n_pad != n:
        x2 = jnp.pad(x2, ((0, n_pad - n), (0, 0)))
        t2 = jnp.pad(t2, ((0, n_pad - n), (0, 0)))

    wt = weight.astype(jnp.float32).T                 # (E, 24)
    b2 = bias.astype(jnp.float32).reshape(1, NUM_CLASSES)

    grid = n_pad // tm_eff
    kernel = partial(_masked_hour_kernel, tm=tm_eff, n_valid=n)

    partials = pl.pallas_call(
        kernel,
        out_shape=jax.ShapeDtypeStruct((grid, 1, 1), jnp.float32),
        grid_spec=pltpu.PrefetchScalarGridSpec(
            num_scalar_prefetch=0,
            grid=(grid,),
            in_specs=[
                pl.BlockSpec((tm_eff, E), lambda i: (i, 0)),           # activation tile
                pl.BlockSpec((E, NUM_CLASSES), lambda i: (0, 0)),      # weight (constant)
                pl.BlockSpec((1, NUM_CLASSES), lambda i: (0, 0)),      # bias (constant)
                pl.BlockSpec((tm_eff, 1), lambda i: (i, 0)),           # target hours
            ],
            out_specs=pl.BlockSpec((1, 1, 1), lambda i: (i, 0, 0)),    # per-tile partial
        ),
        compiler_params=pltpu.CompilerParams(
            # Every grid step writes its own output block -> parallel (megacore on v7x).
            dimension_semantics=("parallel",)),
    )(x2, wt, b2, t2)

    # Tiny XLA reduce over the (grid,) partials + mean scale.
    return jnp.sum(partials) / n


if __name__ == "__main__":
    B, L, E = 2, 8, 32
    key = jax.random.PRNGKey(0)
    kx, kw, kb, kh = jax.random.split(key, 4)

    x = jax.random.normal(kx, (B, L, E), jnp.float32)
    bound = 1.0 / math.sqrt(E)  # nn.Linear default init range
    weight = jax.random.uniform(kw, (NUM_CLASSES, E), jnp.float32, -bound, bound)
    bias = jax.random.uniform(kb, (NUM_CLASSES,), jnp.float32, -bound, bound)
    origin_hour = jax.random.randint(kh, (B, L), 0, NUM_CLASSES, dtype=jnp.int32)

    loss = jax.block_until_ready(masked_hour_loss(x, origin_hour, weight, bias))

    # Pure-JAX reference of the PyTorch forward (eval-mode dropout).
    logits = jnp.dot(x.reshape(-1, E), weight.T,
                     precision=jax.lax.Precision.HIGHEST) + bias
    m = jnp.max(logits, axis=-1, keepdims=True)
    lse = (m + jnp.log(jnp.sum(jnp.exp(logits - m), axis=-1, keepdims=True)))[:, 0]
    tgt = jnp.take_along_axis(logits, origin_hour.reshape(-1, 1), axis=-1)[:, 0]
    ref = jnp.mean(lse - tgt)

    assert loss.shape == ()
    assert loss.dtype == jnp.float32
    assert jnp.allclose(loss, ref, atol=1e-5, rtol=1e-5), (loss, ref)
    print("KERNEL_OK")
</pallas_src>

<mosaic_0001>
module attributes {stable_mosaic.version = 11 : i64} {
  func.func @_masked_hour_kernel(%arg0: i32, %arg1: memref<16x32xf32, #tpu.memory_space<vmem>>, %arg2: memref<32x24xf32, #tpu.memory_space<vmem>>, %arg3: memref<1x24xf32, #tpu.memory_space<vmem>>, %arg4: memref<16x1xi32, #tpu.memory_space<vmem>>, %arg5: memref<1x1x1xf32, #tpu.memory_space<vmem>>) attributes {dimension_semantics = [#tpu.dimension_semantics<parallel>], iteration_bounds = array<i64: 1>, scalar_prefetch = 0 : i64, scratch_operands = 0 : i64, tpu.core_type = #tpu.core_type<tc>, window_params = [{transform_indices = @transform_0, window_bounds = array<i64: 16, 32>}, {pipeline_mode = #tpu.pipeline_mode<synchronous>, transform_indices = @transform_1, window_bounds = array<i64: 32, 24>}, {pipeline_mode = #tpu.pipeline_mode<synchronous>, transform_indices = @transform_2, window_bounds = array<i64: 1, 24>}, {transform_indices = @transform_3, window_bounds = array<i64: 16, 1>}, {transform_indices = @transform_4, window_bounds = array<i64: 1, 1, 1>}]} {
    %c0 = arith.constant 0 : index
    %c0_0 = arith.constant 0 : index
    %0 = vector.load %arg1[%c0, %c0_0] : memref<16x32xf32, #tpu.memory_space<vmem>>, vector<16x32xf32>
    %c0_1 = arith.constant 0 : index
    %c0_2 = arith.constant 0 : index
    %1 = vector.load %arg2[%c0_1, %c0_2] : memref<32x24xf32, #tpu.memory_space<vmem>>, vector<32x24xf32>
    %cst = arith.constant dense<0.000000e+00> : vector<16x24xf32>
    %2 = tpu.matmul %0, %1, %cst {dimension_numbers = #tpu.dot_dimension_numbers<[1], [0], [0], [1], [0, 0, 1, 1], [], []>} : vector<16x32xf32>, vector<32x24xf32>, vector<16x24xf32> -> vector<16x24xf32>
    %c0_3 = arith.constant 0 : index
    %c0_4 = arith.constant 0 : index
    %3 = vector.load %arg3[%c0_3, %c0_4] : memref<1x24xf32, #tpu.memory_space<vmem>>, vector<1x24xf32>
    %4 = vector.broadcast %3 : vector<1x24xf32> to vector<16x24xf32>
    %5 = arith.addf %2, %4 : vector<16x24xf32>
    %cst_5 = arith.constant dense<0xFF800000> : vector<16xf32>
    %6 = vector.multi_reduction <maximumf>, %5, %cst_5 [1] : vector<16x24xf32> to vector<16xf32>
    %7 = vector.shape_cast %6 : vector<16xf32> to vector<16x1xf32>
    %8 = vector.broadcast %7 : vector<16x1xf32> to vector<16x24xf32>
    %9 = arith.subf %5, %8 : vector<16x24xf32>
    %10 = math.exp %9 : vector<16x24xf32>
    %cst_6 = arith.constant dense<0.000000e+00> : vector<16xf32>
    %11 = vector.multi_reduction <add>, %10, %cst_6 [1] : vector<16x24xf32> to vector<16xf32>
    %12 = vector.shape_cast %11 : vector<16xf32> to vector<16x1xf32>
    %13 = math.log %12 : vector<16x1xf32>
    %14 = arith.addf %7, %13 : vector<16x1xf32>
    %15 = tpu.iota {dimensions = array<i32: 1>} : vector<16x24xi32>
    %c0_7 = arith.constant 0 : index
    %c0_8 = arith.constant 0 : index
    %16 = vector.load %arg4[%c0_7, %c0_8] : memref<16x1xi32, #tpu.memory_space<vmem>>, vector<16x1xi32>
    %17 = vector.broadcast %16 : vector<16x1xi32> to vector<16x24xi32>
    %18 = arith.cmpi eq, %15, %17 : vector<16x24xi32>
    %cst_9 = arith.constant 0.000000e+00 : f32
    %19 = vector.broadcast %cst_9 : f32 to vector<16x24xf32>
    %20 = arith.select %18, %5, %19 : vector<16x24xi1>, vector<16x24xf32>
    %cst_10 = arith.constant dense<0.000000e+00> : vector<16xf32>
    %21 = vector.multi_reduction <add>, %20, %cst_10 [1] : vector<16x24xf32> to vector<16xf32>
    %22 = vector.shape_cast %21 : vector<16xf32> to vector<16x1xf32>
    %23 = arith.subf %14, %22 : vector<16x1xf32>
    %c16_i32 = arith.constant 16 : i32
    %24 = arith.muli %arg0, %c16_i32 : i32
    %25 = tpu.iota {dimensions = array<i32: 0>} : vector<16x1xi32>
    %26 = vector.broadcast %24 : i32 to vector<16x1xi32>
    %27 = arith.addi %26, %25 : vector<16x1xi32>
    %c16_i32_11 = arith.constant 16 : i32
    %28 = vector.broadcast %c16_i32_11 : i32 to vector<16x1xi32>
    %29 = arith.cmpi slt, %27, %28 : vector<16x1xi32>
    %cst_12 = arith.constant 0.000000e+00 : f32
    %30 = vector.broadcast %cst_12 : f32 to vector<16x1xf32>
    %31 = arith.select %29, %23, %30 : vector<16x1xi1>, vector<16x1xf32>
    %32 = vector.shape_cast %31 : vector<16x1xf32> to vector<1x16x1xf32>
    %cst_13 = arith.constant dense<0.000000e+00> : vector<1xf32>
    %33 = vector.multi_reduction <add>, %32, %cst_13 [1, 2] : vector<1x16x1xf32> to vector<1xf32>
    %34 = vector.shape_cast %33 : vector<1xf32> to vector<1x1x1xf32>
    %35 = vector.extract %34[0, 0, 0] : f32 from vector<1x1x1xf32>
    %36 = vector.broadcast %35 : f32 to vector<1x1xf32>
    %c0_14 = arith.constant 0 : index
    %c0_15 = arith.constant 0 : index
    %c0_16 = arith.constant 0 : index
    %37 = vector.load %arg5[%c0_14, %c0_15, %c0_16] : memref<1x1x1xf32, #tpu.memory_space<vmem>>, vector<1x1x1xf32>
    %38 = vector.shape_cast %37 : vector<1x1x1xf32> to vector<1x1xf32>
    %39 = vector.shape_cast %36 : vector<1x1xf32> to vector<1x1x1xf32>
    tpu.vector_store %arg5[%c0_14, %c0_15, %c0_16], %39 {strides = array<i32>} : memref<1x1x1xf32, #tpu.memory_space<vmem>>, vector<1x1x1xf32>,
    return
  }
  func.func @transform_0(%arg0: i32) -> (i32, i32) {
    %c0_i32 = arith.constant 0 : i32
    %c0_i32_0 = arith.constant 0 : i32
    return %arg0, %c0_i32 : i32, i32
  }
  func.func @transform_1(%arg0: i32) -> (i32, i32) {
    %c0_i32 = arith.constant 0 : i32
    %c0_i32_0 = arith.constant 0 : i32
    %c0_i32_1 = arith.constant 0 : i32
    return %c0_i32, %c0_i32_0 : i32, i32
  }
  func.func @transform_2(%arg0: i32) -> (i32, i32) {
    %c0_i32 = arith.constant 0 : i32
    %c0_i32_0 = arith.constant 0 : i32
    %c0_i32_1 = arith.constant 0 : i32
    return %c0_i32, %c0_i32_0 : i32, i32
  }
  func.func @transform_3(%arg0: i32) -> (i32, i32) {
    %c0_i32 = arith.constant 0 : i32
    %c0_i32_0 = arith.constant 0 : i32
    return %arg0, %c0_i32 : i32, i32
  }
  func.func @transform_4(%arg0: i32) -> (i32, i32, i32) {
    %c0_i32 = arith.constant 0 : i32
    %c0_i32_0 = arith.constant 0 : i32
    %c0_i32_1 = arith.constant 0 : i32
    return %arg0, %c0_i32, %c0_i32_0 : i32, i32, i32
  }
}

</mosaic_0001>

<llo_original>
// kernel: tpu_custom_call.1
$region0: #{tpu_custom_call.1}
  #allocation0 [shape = 'u32[]', space=smem, size = 0x4, offset = 0x4, fixed_abs, tag = 'smem constant byte address 0x4 - core index']
  #allocation1 [shape = 'u32[72,128]{1,0:T(1,128)}', space=vmem, size = 0x9000, scoped, tag = 'internal scratch']
  %s0 = inlined_call_operand.vmem [shape: f32[16,32], index: 0, kind: input, shape index: {}]
  %s1 = inlined_call_operand.vmem [shape: f32[32,24], index: 1, kind: input, shape index: {}]
  %s2 = inlined_call_operand.vmem [shape: f32[1,24], index: 2, kind: input, shape index: {}]
  %s3 = inlined_call_operand.vmem [shape: s32[16,1], index: 3, kind: input, shape index: {}]
  %s4 = inlined_call_operand.hbm [shape: f32[1,1,1], index: 4, kind: output, shape index: {}]
  %s5 = sld [smem:[#allocation0]]
  $region26: #{tpu_custom_call.1} parent=0
    _
  %s7 = ssub.s32 1, %s5
  %s8 = scalar_select 0, %s7, %s5
  $region1: #{tpu_custom_call.1} parent=0
    #allocation2 [shape = 'u8[512]{0}', space=vmem, size = 0x400, scoped, tag = 'output window, operand 0, single buffered']
    #allocation3 [shape = 's32[1]{0}', space=sflag, size = 0x4, scoped, tag = 'scoped memory for tpu_custom_call.1']
    %9 = vsyncpa [#allocation3], 0
    // Predicated region
    $region2: #{tpu_custom_call.1} parent=1 // pred_check
      _
    $region3: #{tpu_custom_call.1} parent=1 // pred_check_branch
      %11 = sbr.rel (0) target = $region5
    $region4: #{tpu_custom_call.1} parent=1 // pred_region
      _
    $region5: #{tpu_custom_call.1} parent=1 // pred_fallthru
      _
    // Predicated region
    $region6: #{tpu_custom_call.1} parent=1 // pred_check
      _
    $region7: #{tpu_custom_call.1} parent=1 // pred_check_branch
      %13 = sbr.rel (0) target = $region9
    $region8: #{tpu_custom_call.1} parent=1 // pred_region
      _
    $region9: #{tpu_custom_call.1} parent=1 // pred_fallthru
      _
    // Predicated region
    $region10: #{tpu_custom_call.1} parent=1 // pred_check
      _
    $region11: #{tpu_custom_call.1} parent=1 // pred_check_branch
      %15 = sbr.rel (0) target = $region13
    $region12: #{tpu_custom_call.1} parent=1 // pred_region
      _
    $region13: #{tpu_custom_call.1} parent=1 // pred_fallthru
      _
    // Predicated region
    $region14: #{tpu_custom_call.1} parent=1 // pred_check
      _
    $region15: #{tpu_custom_call.1} parent=1 // pred_check_branch
      %17 = sbr.rel (0) target = $region17
    $region16: #{tpu_custom_call.1} parent=1 // pred_region
      _
    $region17: #{tpu_custom_call.1} parent=1 // pred_fallthru
      _
    %v18 = vld [vmem:[%s0] sm:$0xff]
    %v19 = vld [vmem:[%s0 + $0x8] sm:$0xff]
    %v20 = vld [vmem:[%s1] sm:$0xff]
    %v21 = vld [vmem:[%s1 + $0x8] sm:$0xff]
    %v22 = vld [vmem:[%s1 + $0x10] sm:$0xff]
    %v23 = vld [vmem:[%s1 + $0x18] sm:$0xff]
    %v24 = vld [vmem:[%s2] sm:$0x1]
    %v26 = vperm.slane %v24, 0
    %vm28 = vcmask 261120
    %v30 = vsel %vm28, %v18, 0
    %v33 = vsel %vm28, %v19, 0
    %35 = vmatpush.msra.mxu0 0.0
    %36 = vmatpush.msra.mxu0 0.0
    %37 = vmatpush.msra.mxu0 0.0
    %38 = vmatpush.msra.mxu0 0.0
    %39 = vmatpush.msra.mxu0 0.0
    %40 = vmatpush.msra.mxu0 0.0
    %41 = vmatpush.msra.mxu0 0.0
    %42 = vmatpush.msra.mxu0 0.0
    %43 = vmatpush.msra.mxu0 0.0
    %44 = vmatpush.msra.mxu0 0.0
    %45 = vmatpush.msra.mxu0 0.0
    %46 = vmatpush.msra.mxu0 0.0
    %47 = vmatpush.msra.mxu0 %v23
    %48 = vmatpush.msra.mxu0 %v22
    %49 = vmatpush.msra.mxu0 %v21
    %50 = vmatpush.msra.mxu0 %v20
    %51 = vmatmul.f32.gmra.mxu0 %v30
    %v52 = vpop.f32.mrf.mxu0
    %v53 = vadd.f32 %v26, %v52
    %54 = vmatmul.f32.gmra.mxu0 %v33
    %v55 = vpop.f32.mrf.mxu0
    %v56 = vadd.f32 %v26, %v55
    %57 = vdwg.mxu0
    %vm58 = vcmask 195584
    %v59 = vsel %vm58, %v53, -inf
    %60 = vmax.xlane.f32.xlu0 %v59
    %v61 = vpop.xlane.xlu0 %60
    %v62 = vsel %vm58, %v56, -inf
    %63 = vmax.xlane.f32.xlu0 %v62
    %v64 = vpop.xlane.xlu0 %63
    %v65 = vsub.f32 %v53, %v61
    %v66 = vsub.f32 %v56, %v64
    %v67 = vmul.f32 %v65, 1.442695
    %v68 = vpow.pop %v67
    %v69 = vmul.f32 %v66, 1.442695
    %v70 = vpow.pop %v69
    %v71 = vsel %vm58, %v68, 0.0
    %72 = vadd.xlane.f32.xlu0 %v71
    %v73 = vpop.xlane.xlu0 %72
    %v74 = vsel %vm58, %v70, 0.0
    %75 = vadd.xlane.f32.xlu0 %v74
    %v76 = vpop.xlane.xlu0 %75
    %v77 = vlog2.pop %v73
    %v78 = vmul.f32 %v77, 0.6931472
    %v79 = vlog2.pop %v76
    %v80 = vmul.f32 %v79, 0.6931472
    %v81 = vadd.f32 %v61, %v78
    %v82 = vadd.f32 %v64, %v80
    %v83 = vlaneseq
    %v84 = vand.u32 %v83, 127
    %v85 = vld [vmem:[%s3] sm:$0xff]
    %v86 = vld [vmem:[%s3 + $0x8] sm:$0xff]
    %87 = vset.pattern.permute.xlu0 0
    %88 = vperm.xlu0 %87, %v85
    %v89 = vpop.permute.xlu0 %88
    %90 = vset.pattern.permute.xlu0 0
    %91 = vperm.xlu0 %90, %v86
    %v92 = vpop.permute.xlu0 %91
    %vm93 = vcmp.eq.s32.totalorder %v84, %v89
    %vm94 = vcmp.eq.s32.totalorder %v84, %v92
    %v95 = vsel %vm93, %v53, 0.0
    %v96 = vsel %vm94, %v56, 0.0
    %v97 = vsel %vm58, %v95, 0.0
    %98 = vadd.xlane.f32.xlu0 %v97
    %v99 = vpop.xlane.xlu0 %98
    %v100 = vsel %vm58, %v96, 0.0
    %101 = vadd.xlane.f32.xlu0 %v100
    %v102 = vpop.xlane.xlu0 %101
    %v103 = vsub.f32 %v81, %v99
    %v104 = vsub.f32 %v82, %v102
    %s105 = smul.u32 0, 16
    %v106 = vlaneseq
    %v107 = vshrl.u32 %v106, 7
    %v108 = vadd.s32 %v107, 8
    %v109 = vstv %s105
    %v110 = vadd.s32 %v109, %v107
    %v111 = vadd.s32 %v109, %v108
    %vm112 = vcmp.lt.s32.totalorder %v110, 16
    %vm113 = vcmp.lt.s32.totalorder %v111, 16
    %v114 = vsel %vm112, %v103, 0.0
    %v115 = vsel %vm113, %v104, 0.0
    %vm116 = vcmask 7168
    %v117 = vsel %vm116, %v114, 0.0
    %v118 = vsel %vm116, %v115, 0.0
    %v119 = vadd.f32 %v117, %v118
    %120 = vadd.xlane.f32.xlu0 %v119
    %v121 = vpop.xlane.xlu0 %120
    %v122 = vrot.slane %v121, 4
    %v123 = vadd.f32 %v121, %v122
    %v124 = vrot.slane %v123, 2
    %v125 = vadd.f32 %v123, %v124
    %v126 = vrot.slane %v125, 1
    %v127 = vadd.f32 %v125, %v126
    %s128 = vtos %v127
    %v129 = vstv %s128
    %vm130 = vcmask 0
    %131 = vst.msk [vmem:[#allocation2] sm:$0x1] %vm130, %v129
    // Predicated region
    $region18: #{tpu_custom_call.1} parent=1 // pred_check
      _
    $region19: #{tpu_custom_call.1} parent=1 // pred_check_branch
      %133 = sbr.rel (0) target = $region21
    $region20: #{tpu_custom_call.1} parent=1 // pred_region
      %135 = vsyncadd [#allocation3], 0
      %s137 = sshll.u32 [#allocation2], 4
      %s138 = int_to_ptr.vmem [resolvable:$true] %s137
      %s139 = sshll.u32 %s4, 4
      %s140 = int_to_ptr.hbm [resolvable:$true] %s139
      %142 = dma.vmem_to_hbm [thread:$0]  %s138, 16, %s140, [#allocation3]
    $region21: #{tpu_custom_call.1} parent=1 // pred_fallthru
      _
    // Predicated region
    $region22: #{tpu_custom_call.1} parent=1 // pred_check
      _
    $region23: #{tpu_custom_call.1} parent=1 // pred_check_branch
      %144 = sbr.rel (0) target = $region25
    $region24: #{tpu_custom_call.1} parent=1 // pred_region
      %146 = dma.done [#allocation3], 16
    $region25: #{tpu_custom_call.1} parent=1 // pred_fallthru
      _
    %147 = vsyncpa [#allocation3], 1

</llo_original>
